<compile_context>
chip_gen: v7x
topology: tpu7x:2x2x1
jax: 0.10.0
libtpu: 0.0.40
codegen_flags: <defaults>
</compile_context>

<pallas_src>
import functools
import math

import jax
import jax.numpy as jnp
from jax.experimental import pallas as pl
from jax.experimental.pallas import tpu as pltpu

_LOG_2PI = math.log(2.0 * math.pi)
_OUT_ROWS = 8          # output slab rows: 0=logprob, 1=value, 2=entropy (discrete)
_DEFAULT_TILE = 2048   # upper bound on batch tile (lanes); see _choose_tiles


def _round_up(x, m):
    return ((x + m - 1) // m) * m


# ---------------------------------------------------------------------------
# In-kernel fused MLP, transposed layout.
#   x:  [in_features, TB]   (batch on the lane axis)
#   w:  [out_features, in_features]  (bf16)    b: [out_features, 1] (f32)
# ---------------------------------------------------------------------------
def _mlp3_t(x, w1, b1, w2, b2, w3, b3):
    h1 = jnp.tanh(jnp.dot(w1, x, preferred_element_type=jnp.float32) + b1)
    # TODO(synk): on v6e/v7x the two tanh layers could run in bf16 on the EUP;
    # kept in f32 so the same kernel is optimal on v5e too.
    h2 = jnp.tanh(jnp.dot(w2, h1.astype(w2.dtype),
                          preferred_element_type=jnp.float32) + b2)
    return jnp.dot(w3, h2.astype(w3.dtype),
                   preferred_element_type=jnp.float32) + b3


def _pack_rows(out_ref, *row_vals):
    """Write the [8, TB] output slab: row_vals[i] -> row i, remaining rows 0."""
    rows = jax.lax.broadcasted_iota(jnp.int32, out_ref.shape, 0)
    acc = jnp.zeros(out_ref.shape, jnp.float32)
    for r, v in enumerate(row_vals):
        acc = jnp.where(rows == r, v, acc)
    out_ref[...] = acc


# ---------------------------------------------------------------------------
# Continuous-action evaluate(): diag MultivariateNormal log_prob + value.
# (entropy is batch-independent and computed in the wrapper.)
# ---------------------------------------------------------------------------
def _continuous_evaluate_kernel(xa_ref, nhiv_ref, lpc_ref,
                                w1, b1, w2, b2, w3, b3, out_ref,
                                *, s_dim, a_dim):
    xa = xa_ref[...]                                       # [S+A, TB] bf16
    state = xa[:s_dim]
    action = xa[s_dim:s_dim + a_dim].astype(jnp.float32)   # [A, TB]

    h = _mlp3_t(state, w1[...], b1[...], w2[...], b2[...], w3[...], b3[...])
    action_mean = h[:a_dim]                                # [A, TB]
    value = h[a_dim:a_dim + 1]                             # [1, TB]

    # logprob = -0.5*(sum(diff^2/var) + A*log(2pi) + sum(log var)); the exact
    # -0.5/var vector and the constant are precomputed on the host.
    diff = action - action_mean
    logprob = lpc_ref[...] + jnp.sum(diff * diff * nhiv_ref[...],
                                     axis=0, keepdims=True)          # [1, TB]
    _pack_rows(out_ref, logprob, value)


# ---------------------------------------------------------------------------
# Discrete-action evaluate(): Categorical log_prob / entropy + value.
# ---------------------------------------------------------------------------
def _discrete_evaluate_kernel(state_ref, action_ref,
                              w1, b1, w2, b2, w3, b3, out_ref, *, a_dim):
    h = _mlp3_t(state_ref[...], w1[...], b1[...], w2[...], b2[...], w3[...],
                b3[...])
    logits = h[:a_dim]                                     # [A, TB]
    value = h[a_dim:a_dim + 1]                             # [1, TB]

    m = jnp.max(logits, axis=0, keepdims=True)
    z = logits - m
    lse = jnp.log(jnp.sum(jnp.exp(z), axis=0, keepdims=True))
    log_p = z - lse
    p = jnp.exp(log_p)

    ids = jax.lax.broadcasted_iota(jnp.int32, log_p.shape, 0)
    # NOTE: upstream must guarantee 0 <= action < action_dim (out-of-range
    # indices silently produce logprob = 0).
    onehot = (ids == action_ref[...]).astype(jnp.float32)

    logprob = jnp.sum(onehot * log_p, axis=0, keepdims=True)
    entropy = -jnp.sum(p * log_p, axis=0, keepdims=True)
    _pack_rows(out_ref, logprob, value, entropy)


# ---------------------------------------------------------------------------
# Parameter fusion (done ONCE at init, not per call)
# ---------------------------------------------------------------------------
def _block_diag(a, b):
    ra, ca = a.shape
    rb_, cb = b.shape
    top = jnp.concatenate([a, jnp.zeros((ra, cb), a.dtype)], axis=1)
    bot = jnp.concatenate([jnp.zeros((rb_, ca), b.dtype), b], axis=1)
    return jnp.concatenate([top, bot], axis=0)


def fuse_actor_critic(actor_params, critic_params, *,
                      weight_dtype=jnp.bfloat16, head_rows=_OUT_ROWS):
    """Fuse actor/critic trunks into one block-diagonal MLP, transposed
    ([out_features, in_features]) and cast to `weight_dtype`; the fused head
    ([A actor rows | 1 critic row]) is zero-padded to `head_rows` sublanes."""
    aw1, ab1, aw2, ab2, aw3, ab3 = actor_params
    cw1, cb1, cw2, cb2, cw3, cb3 = critic_params
    w1 = jnp.concatenate([aw1, cw1], axis=1)          # [S, H1a+H1c]
    b1 = jnp.concatenate([ab1, cb1], axis=1)
    w2 = _block_diag(aw2, cw2)                        # [H1f, H2f]
    b2 = jnp.concatenate([ab2, cb2], axis=1)
    w3 = _block_diag(aw3, cw3)                        # [H2f, A+1]
    b3 = jnp.concatenate([ab3, cb3], axis=1)
    pad = _round_up(w3.shape[1], head_rows) - w3.shape[1]
    if pad:
        w3 = jnp.concatenate([w3, jnp.zeros((w3.shape[0], pad), w3.dtype)], 1)
        b3 = jnp.concatenate([b3, jnp.zeros((1, pad), b3.dtype)], 1)
    return (w1.T.astype(weight_dtype), b1.T.astype(jnp.float32),
            w2.T.astype(weight_dtype), b2.T.astype(jnp.float32),
            w3.T.astype(weight_dtype), b3.T.astype(jnp.float32))


# ---------------------------------------------------------------------------
# Wrappers
# ---------------------------------------------------------------------------
def _choose_tiles(batch, tile):
    """Pick (tile_batch, padded_batch, n_tiles).  Tiles are lane-aligned
    (multiples of 128) whenever we tile, and we prefer >=2 tiles so the
    'parallel' grid axis shards across v7x's two TensorCores."""
    b8 = _round_up(batch, 8)
    if b8 <= 128:
        return b8, b8, 1                       # single small tile
    b128 = _round_up(batch, 128)
    half = -(-b128 // 2)                       # ceil(b128 / 2)
    tb = min(_round_up(tile, 128), half)
    tb = max(128, (tb // 128) * 128)
    b_pad = _round_up(b128, tb)
    return tb, b_pad, b_pad // tb


def _pad_cols(x, cols):
    if x.shape[-1] == cols:
        return x
    return jnp.pad(x, ((0, 0), (0, cols - x.shape[-1])))


def _call_eval_kernel(kernel, batched_args, const_args, batch, tile):
    tb, b_pad, nb = _choose_tiles(batch, tile)
    batched = tuple(_pad_cols(a, b_pad) for a in batched_args)
    args = batched + tuple(const_args)

    in_specs = (
        [pl.BlockSpec((a.shape[0], tb), lambda i: (0, i)) for a in batched]
        + [pl.BlockSpec(a.shape, lambda i: (0, 0)) for a in const_args])
    out_spec = pl.BlockSpec((_OUT_ROWS, tb), lambda i: (0, i))

    # Advisory cost estimate (matmul flops, tanh count, HBM bytes).
    w_shapes = [a.shape for a in const_args
                if a.ndim == 2 and a.shape[0] > 1 and a.shape[1] > 1]
    mm_flops = 2 * b_pad * sum(r * c for r, c in w_shapes)
    hidden = sum(r for r, _ in w_shapes[:-1]) if len(w_shapes) > 1 else 0
    bytes_accessed = (sum(int(a.size) * a.dtype.itemsize for a in args)
                      + 4 * _OUT_ROWS * b_pad)
    cost = pl.CostEstimate(flops=int(mm_flops),
                           transcendentals=int(b_pad * hidden),
                           bytes_accessed=int(bytes_accessed))

    out = pl.pallas_call(
        kernel,
        out_shape=jax.ShapeDtypeStruct((_OUT_ROWS, b_pad), jnp.float32),
        grid_spec=pltpu.PrefetchScalarGridSpec(
            num_scalar_prefetch=0,
            grid=(nb,),
            in_specs=in_specs,
            out_specs=out_spec),
        compiler_params=pltpu.CompilerParams(
            dimension_semantics=("parallel",)),
        cost_estimate=cost,
    )(*args)
    return out        # [8, b_pad]: row0=logprob, row1=value, row2=entropy


def evaluate_continuous(state, action, action_var, fused_params,
                        *, tile=_DEFAULT_TILE):
    batch, s_dim = state.shape
    action = action.reshape(batch, -1)                 # torch reshape for A==1
    a_dim = action.shape[-1]
    w1, b1, w2, b2, w3, b3 = fused_params
    in_dt = w1.dtype

    # One merged, feature-major (batch-on-lanes) input slab: [S+A, B].
    xa_t = jnp.concatenate([state.T.astype(in_dt), action.T.astype(in_dt)], 0)

    av = action_var.astype(jnp.float32).reshape(-1)
    logdet = jnp.sum(jnp.log(av))
    neg_half_inv_var = (-0.5 / av).reshape(-1, 1).astype(jnp.float32)
    lp_const = (-0.5 * (a_dim * _LOG_2PI + logdet)
                ).reshape(1, 1).astype(jnp.float32)

    kernel = functools.partial(_continuous_evaluate_kernel,
                               s_dim=s_dim, a_dim=a_dim)
    out = _call_eval_kernel(kernel, (xa_t,),
                            (neg_half_inv_var, lp_const,
                             w1, b1, w2, b2, w3, b3), batch, tile)
    logprob = out[0, :batch]
    value = out[1, :batch].reshape(-1, 1)
    # Diagonal-Gaussian entropy is batch-independent -> computed here, exactly.
    entropy = jnp.full((batch,),
                       0.5 * (a_dim * (1.0 + _LOG_2PI) + logdet), jnp.float32)
    return logprob, value, entropy


def evaluate_discrete(state, action_idx, fused_params, action_dim,
                      *, tile=_DEFAULT_TILE):
    batch, _ = state.shape
    w1, b1, w2, b2, w3, b3 = fused_params
    state_t = state.T.astype(w1.dtype)                       # [S, B]
    action_row = action_idx.reshape(1, -1).astype(jnp.int32)  # [1, B]

    kernel = functools.partial(_discrete_evaluate_kernel, a_dim=action_dim)
    out = _call_eval_kernel(kernel, (state_t, action_row),
                            (w1, b1, w2, b2, w3, b3), batch, tile)
    return out[0, :batch], out[1, :batch].reshape(-1, 1), out[2, :batch]


# ---------------------------------------------------------------------------
# Deterministic parameter init (PyTorch nn.Linear default: U(-1/sqrt(in), .))
# ---------------------------------------------------------------------------
def _init_linear(key, fan_in, fan_out):
    kw, kb = jax.random.split(key)
    bound = 1.0 / math.sqrt(fan_in)
    w = jax.random.uniform(kw, (fan_in, fan_out), jnp.float32, -bound, bound)
    b = jax.random.uniform(kb, (1, fan_out), jnp.float32, -bound, bound)
    return w, b


def init_mlp3(key, dims):
    keys = jax.random.split(key, 3)
    params = []
    for k, (di, do) in zip(keys, zip(dims[:-1], dims[1:])):
        w, b = _init_linear(k, di, do)
        params += [w, b]
    return tuple(params)


# TODO(synk): act()'s dist.sample() is stochastic (torch RNG) and is left out
# of the kernel; evaluate() semantics (log_prob, value, entropy) are covered.

if __name__ == "__main__":
    STATE_DIM, H1, H2, ACTION_DIM = 16, 64, 64, 4
    ACTION_STD_INIT = 0.6

    key = jax.random.PRNGKey(0)
    (k_actor, k_critic, k_state, k_act, k_disc,
     k_state2, k_act2) = jax.random.split(key, 7)

    actor_params = init_mlp3(k_actor, (STATE_DIM, H1, H2, ACTION_DIM))
    critic_params = init_mlp3(k_critic, (STATE_DIM, H1, H2, 1))
    fused_params = fuse_actor_critic(actor_params, critic_params)
    action_var = jnp.full((ACTION_DIM,), ACTION_STD_INIT * ACTION_STD_INIT,
                          jnp.float32)

    # Reference mirroring the kernel's bf16 rounding (bf16 inputs/weights,
    # f32 accumulate + tanh) so tolerances stay tight.
    def rb(a):
        return a.astype(jnp.bfloat16).astype(jnp.float32)

    def mlp_ref(x, p):
        w1, b1, w2, b2, w3, b3 = p
        h1 = jnp.tanh(rb(x) @ rb(w1) + b1)
        h2 = jnp.tanh(rb(h1) @ rb(w2) + b2)
        return rb(h2) @ rb(w3) + b3

    def cont_ref(st, ac):
        mean = mlp_ref(st, actor_params)
        val = mlp_ref(st, critic_params)
        diff = rb(ac) - mean
        lp = -0.5 * (jnp.sum(diff * diff / action_var, -1)
                     + ACTION_DIM * _LOG_2PI + jnp.sum(jnp.log(action_var)))
        ent = jnp.full((st.shape[0],), 0.5 * ACTION_DIM * (1.0 + _LOG_2PI)
                       + 0.5 * jnp.sum(jnp.log(action_var)))
        return lp, val, ent

    # --- continuous, small batch -> single-tile path ------------------------
    B = 24
    state = jax.random.normal(k_state, (B, STATE_DIM), jnp.float32)
    action_c = jax.random.normal(k_act, (B, ACTION_DIM), jnp.float32)
    lp_c, val_c, ent_c = evaluate_continuous(state, action_c, action_var,
                                             fused_params)
    jax.block_until_ready((lp_c, val_c, ent_c))
    lp_r, val_r, ent_r = cont_ref(state, action_c)
    assert jnp.allclose(lp_c, lp_r, rtol=2e-3, atol=2e-3)
    assert jnp.allclose(val_c, val_r, rtol=2e-3, atol=2e-3)
    assert jnp.allclose(ent_c, ent_r, rtol=1e-6, atol=1e-6)

    # --- continuous, B=200, tile=128 -> 2 lane-aligned tiles (parallel grid) -
    B2 = 200
    state2 = jax.random.normal(k_state2, (B2, STATE_DIM), jnp.float32)
    action2 = jax.random.normal(k_act2, (B2, ACTION_DIM), jnp.float32)
    lp2, val2, ent2 = evaluate_continuous(state2, action2, action_var,
                                          fused_params, tile=128)
    jax.block_until_ready((lp2, val2, ent2))
    lp2_r, val2_r, ent2_r = cont_ref(state2, action2)
    assert jnp.allclose(lp2, lp2_r, rtol=2e-3, atol=2e-3)
    assert jnp.allclose(val2, val2_r, rtol=2e-3, atol=2e-3)
    assert jnp.allclose(ent2, ent2_r, rtol=1e-6, atol=1e-6)

    # --- discrete, small batch ----------------------------------------------
    action_d = jax.random.randint(k_disc, (B,), 0, ACTION_DIM, jnp.int32)
    lp_d, val_d, ent_d = evaluate_discrete(state, action_d, fused_params,
                                           ACTION_DIM)
    jax.block_until_ready((lp_d, val_d, ent_d))
    logits_r = mlp_ref(state, actor_params)
    logp_r = jax.nn.log_softmax(logits_r, -1)
    lp_dr = jnp.take_along_axis(logp_r, action_d[:, None], axis=-1)[:, 0]
    ent_dr = -jnp.sum(jnp.exp(logp_r) * logp_r, -1)
    assert jnp.allclose(lp_d, lp_dr, rtol=2e-3, atol=2e-3)
    assert jnp.allclose(val_d, val_r, rtol=2e-3, atol=2e-3)
    assert jnp.allclose(ent_d, ent_dr, rtol=2e-3, atol=2e-3)

    print("KERNEL_OK")
</pallas_src>

<mosaic_0001>
module attributes {stable_mosaic.version = 11 : i64} {
  func.func @_continuous_evaluate_kernel(%arg0: i32, %arg1: memref<20x24xbf16, #tpu.memory_space<vmem>>, %arg2: memref<4x1xf32, #tpu.memory_space<vmem>>, %arg3: memref<1x1xf32, #tpu.memory_space<vmem>>, %arg4: memref<128x16xbf16, #tpu.memory_space<vmem>>, %arg5: memref<128x1xf32, #tpu.memory_space<vmem>>, %arg6: memref<128x128xbf16, #tpu.memory_space<vmem>>, %arg7: memref<128x1xf32, #tpu.memory_space<vmem>>, %arg8: memref<8x128xbf16, #tpu.memory_space<vmem>>, %arg9: memref<8x1xf32, #tpu.memory_space<vmem>>, %arg10: memref<8x24xf32, #tpu.memory_space<vmem>>) attributes {dimension_semantics = [#tpu.dimension_semantics<parallel>], iteration_bounds = array<i64: 1>, scalar_prefetch = 0 : i64, scratch_operands = 0 : i64, tpu.core_type = #tpu.core_type<tc>, window_params = [{transform_indices = @transform_0, window_bounds = array<i64: 20, 24>}, {pipeline_mode = #tpu.pipeline_mode<synchronous>, transform_indices = @transform_1, window_bounds = array<i64: 4, 1>}, {pipeline_mode = #tpu.pipeline_mode<synchronous>, transform_indices = @transform_2, window_bounds = array<i64: 1, 1>}, {pipeline_mode = #tpu.pipeline_mode<synchronous>, transform_indices = @transform_3, window_bounds = array<i64: 128, 16>}, {pipeline_mode = #tpu.pipeline_mode<synchronous>, transform_indices = @transform_4, window_bounds = array<i64: 128, 1>}, {pipeline_mode = #tpu.pipeline_mode<synchronous>, transform_indices = @transform_5, window_bounds = array<i64: 128, 128>}, {pipeline_mode = #tpu.pipeline_mode<synchronous>, transform_indices = @transform_6, window_bounds = array<i64: 128, 1>}, {pipeline_mode = #tpu.pipeline_mode<synchronous>, transform_indices = @transform_7, window_bounds = array<i64: 8, 128>}, {pipeline_mode = #tpu.pipeline_mode<synchronous>, transform_indices = @transform_8, window_bounds = array<i64: 8, 1>}, {transform_indices = @transform_9, window_bounds = array<i64: 8, 24>}]} {
    %c0 = arith.constant 0 : index
    %c0_0 = arith.constant 0 : index
    %0 = vector.load %arg1[%c0, %c0_0] : memref<20x24xbf16, #tpu.memory_space<vmem>>, vector<20x24xbf16>
    %1 = vector.extract_strided_slice %0 {offsets = [0, 0], sizes = [16, 24], strides = [1, 1]} : vector<20x24xbf16> to vector<16x24xbf16>
    %2 = vector.extract_strided_slice %0 {offsets = [16, 0], sizes = [4, 24], strides = [1, 1]} : vector<20x24xbf16> to vector<4x24xbf16>
    %3 = arith.extf %2 : vector<4x24xbf16> to vector<4x24xf32>
    %c0_1 = arith.constant 0 : index
    %c0_2 = arith.constant 0 : index
    %4 = vector.load %arg4[%c0_1, %c0_2] : memref<128x16xbf16, #tpu.memory_space<vmem>>, vector<128x16xbf16>
    %c0_3 = arith.constant 0 : index
    %c0_4 = arith.constant 0 : index
    %5 = vector.load %arg5[%c0_3, %c0_4] : memref<128x1xf32, #tpu.memory_space<vmem>>, vector<128x1xf32>
    %c0_5 = arith.constant 0 : index
    %c0_6 = arith.constant 0 : index
    %6 = vector.load %arg6[%c0_5, %c0_6] : memref<128x128xbf16, #tpu.memory_space<vmem>>, vector<128x128xbf16>
    %c0_7 = arith.constant 0 : index
    %c0_8 = arith.constant 0 : index
    %7 = vector.load %arg7[%c0_7, %c0_8] : memref<128x1xf32, #tpu.memory_space<vmem>>, vector<128x1xf32>
    %c0_9 = arith.constant 0 : index
    %c0_10 = arith.constant 0 : index
    %8 = vector.load %arg8[%c0_9, %c0_10] : memref<8x128xbf16, #tpu.memory_space<vmem>>, vector<8x128xbf16>
    %c0_11 = arith.constant 0 : index
    %c0_12 = arith.constant 0 : index
    %9 = vector.load %arg9[%c0_11, %c0_12] : memref<8x1xf32, #tpu.memory_space<vmem>>, vector<8x1xf32>
    %cst = arith.constant dense<0.000000e+00> : vector<128x24xf32>
    %10 = tpu.matmul %4, %1, %cst {dimension_numbers = #tpu.dot_dimension_numbers<[1], [0], [0], [1], [0, 0, 1, 1], [], []>} : vector<128x16xbf16>, vector<16x24xbf16>, vector<128x24xf32> -> vector<128x24xf32>
    %11 = vector.broadcast %5 : vector<128x1xf32> to vector<128x24xf32>
    %12 = arith.addf %10, %11 : vector<128x24xf32>
    %13 = math.tanh %12 : vector<128x24xf32>
    %14 = arith.truncf %13 : vector<128x24xf32> to vector<128x24xbf16>
    %cst_13 = arith.constant dense<0.000000e+00> : vector<128x24xf32>
    %15 = tpu.matmul %6, %14, %cst_13 {dimension_numbers = #tpu.dot_dimension_numbers<[1], [0], [0], [1], [0, 0, 1, 1], [], []>} : vector<128x128xbf16>, vector<128x24xbf16>, vector<128x24xf32> -> vector<128x24xf32>
    %16 = vector.broadcast %7 : vector<128x1xf32> to vector<128x24xf32>
    %17 = arith.addf %15, %16 : vector<128x24xf32>
    %18 = math.tanh %17 : vector<128x24xf32>
    %19 = arith.truncf %18 : vector<128x24xf32> to vector<128x24xbf16>
    %cst_14 = arith.constant dense<0.000000e+00> : vector<8x24xf32>
    %20 = tpu.matmul %8, %19, %cst_14 {dimension_numbers = #tpu.dot_dimension_numbers<[1], [0], [0], [1], [0, 0, 1, 1], [], []>} : vector<8x128xbf16>, vector<128x24xbf16>, vector<8x24xf32> -> vector<8x24xf32>
    %21 = vector.broadcast %9 : vector<8x1xf32> to vector<8x24xf32>
    %22 = arith.addf %20, %21 : vector<8x24xf32>
    %23 = vector.extract_strided_slice %22 {offsets = [0, 0], sizes = [4, 24], strides = [1, 1]} : vector<8x24xf32> to vector<4x24xf32>
    %24 = vector.extract_strided_slice %22 {offsets = [4, 0], sizes = [1, 24], strides = [1, 1]} : vector<8x24xf32> to vector<1x24xf32>
    %25 = arith.subf %3, %23 : vector<4x24xf32>
    %c0_15 = arith.constant 0 : index
    %c0_16 = arith.constant 0 : index
    %26 = vector.load %arg3[%c0_15, %c0_16] : memref<1x1xf32, #tpu.memory_space<vmem>>, vector<1x1xf32>
    %27 = arith.mulf %25, %25 : vector<4x24xf32>
    %c0_17 = arith.constant 0 : index
    %c0_18 = arith.constant 0 : index
    %28 = vector.load %arg2[%c0_17, %c0_18] : memref<4x1xf32, #tpu.memory_space<vmem>>, vector<4x1xf32>
    %29 = vector.broadcast %28 : vector<4x1xf32> to vector<4x24xf32>
    %30 = arith.mulf %27, %29 : vector<4x24xf32>
    %cst_19 = arith.constant dense<0.000000e+00> : vector<24xf32>
    %31 = vector.multi_reduction <add>, %30, %cst_19 [0] : vector<4x24xf32> to vector<24xf32>
    %32 = vector.shape_cast %31 : vector<24xf32> to vector<1x24xf32>
    %33 = vector.broadcast %26 : vector<1x1xf32> to vector<1x24xf32>
    %34 = arith.addf %33, %32 : vector<1x24xf32>
    %35 = tpu.iota {dimensions = array<i32: 0>} : vector<8x24xi32>
    %cst_20 = arith.constant 0.000000e+00 : f32
    %36 = vector.broadcast %cst_20 : f32 to vector<8x24xf32>
    %c0_i32 = arith.constant 0 : i32
    %37 = vector.broadcast %c0_i32 : i32 to vector<8x24xi32>
    %38 = arith.cmpi eq, %35, %37 : vector<8x24xi32>
    %39 = vector.shape_cast %34 : vector<1x24xf32> to vector<1x24xf32>
    %40 = vector.broadcast %39 : vector<1x24xf32> to vector<8x24xf32>
    %41 = arith.select %38, %40, %36 : vector<8x24xi1>, vector<8x24xf32>
    %c1_i32 = arith.constant 1 : i32
    %42 = vector.broadcast %c1_i32 : i32 to vector<8x24xi32>
    %43 = arith.cmpi eq, %35, %42 : vector<8x24xi32>
    %44 = vector.shape_cast %24 : vector<1x24xf32> to vector<1x24xf32>
    %45 = vector.broadcast %44 : vector<1x24xf32> to vector<8x24xf32>
    %46 = arith.select %43, %45, %41 : vector<8x24xi1>, vector<8x24xf32>
    %c0_21 = arith.constant 0 : index
    %c0_22 = arith.constant 0 : index
    %47 = vector.load %arg10[%c0_21, %c0_22] : memref<8x24xf32, #tpu.memory_space<vmem>>, vector<8x24xf32>
    tpu.vector_store %arg10[%c0_21, %c0_22], %46 {strides = array<i32>} : memref<8x24xf32, #tpu.memory_space<vmem>>, vector<8x24xf32>,
    return
  }
  func.func @transform_0(%arg0: i32) -> (i32, i32) {
    %c0_i32 = arith.constant 0 : i32
    %c0_i32_0 = arith.constant 0 : i32
    return %c0_i32, %arg0 : i32, i32
  }
  func.func @transform_1(%arg0: i32) -> (i32, i32) {
    %c0_i32 = arith.constant 0 : i32
    %c0_i32_0 = arith.constant 0 : i32
    %c0_i32_1 = arith.constant 0 : i32
    return %c0_i32, %c0_i32_0 : i32, i32
  }
  func.func @transform_2(%arg0: i32) -> (i32, i32) {
    %c0_i32 = arith.constant 0 : i32
    %c0_i32_0 = arith.constant 0 : i32
    %c0_i32_1 = arith.constant 0 : i32
    return %c0_i32, %c0_i32_0 : i32, i32
  }
  func.func @transform_3(%arg0: i32) -> (i32, i32) {
    %c0_i32 = arith.constant 0 : i32
    %c0_i32_0 = arith.constant 0 : i32
    %c0_i32_1 = arith.constant 0 : i32
    return %c0_i32, %c0_i32_0 : i32, i32
  }
  func.func @transform_4(%arg0: i32) -> (i32, i32) {
    %c0_i32 = arith.constant 0 : i32
    %c0_i32_0 = arith.constant 0 : i32
    %c0_i32_1 = arith.constant 0 : i32
    return %c0_i32, %c0_i32_0 : i32, i32
  }
  func.func @transform_5(%arg0: i32) -> (i32, i32) {
    %c0_i32 = arith.constant 0 : i32
    %c0_i32_0 = arith.constant 0 : i32
    %c0_i32_1 = arith.constant 0 : i32
    return %c0_i32, %c0_i32_0 : i32, i32
  }
  func.func @transform_6(%arg0: i32) -> (i32, i32) {
    %c0_i32 = arith.constant 0 : i32
    %c0_i32_0 = arith.constant 0 : i32
    %c0_i32_1 = arith.constant 0 : i32
    return %c0_i32, %c0_i32_0 : i32, i32
  }
  func.func @transform_7(%arg0: i32) -> (i32, i32) {
    %c0_i32 = arith.constant 0 : i32
    %c0_i32_0 = arith.constant 0 : i32
    %c0_i32_1 = arith.constant 0 : i32
    return %c0_i32, %c0_i32_0 : i32, i32
  }
  func.func @transform_8(%arg0: i32) -> (i32, i32) {
    %c0_i32 = arith.constant 0 : i32
    %c0_i32_0 = arith.constant 0 : i32
    %c0_i32_1 = arith.constant 0 : i32
    return %c0_i32, %c0_i32_0 : i32, i32
  }
  func.func @transform_9(%arg0: i32) -> (i32, i32) {
    %c0_i32 = arith.constant 0 : i32
    %c0_i32_0 = arith.constant 0 : i32
    return %c0_i32, %arg0 : i32, i32
  }
}

</mosaic_0001>

<llo_original>
// kernel: tpu_custom_call.1
$region0: #{tpu_custom_call.1}
  #allocation0 [shape = 'u32[]', space=smem, size = 0x4, offset = 0x4, fixed_abs, tag = 'smem constant byte address 0x4 - core index']
  #allocation1 [shape = 'u32[144,128]{1,0:T(1,128)}', space=vmem, size = 0x12000, scoped, tag = 'internal scratch']
  #allocation2 [shape = 'f32[1,1]{1,0:T(1,128)S(1)}', space=vmem, size = 0x200, scoped, tag = 'scoped memory for tpu_custom_call.1']
  %s0 = inlined_call_operand.vmem [shape: bf16[20,24], index: 0, kind: input, shape index: {}]
  %s1 = inlined_call_operand.vmem [shape: f32[4,1], index: 1, kind: input, shape index: {}]
  %s2 = inlined_call_operand.<no memory space> [shape: f32[1,1], index: 2, kind: input, shape index: {}]
  %s3 = inlined_call_operand.vmem [shape: bf16[128,16], index: 3, kind: input, shape index: {}]
  %s4 = inlined_call_operand.vmem [shape: f32[128,1], index: 4, kind: input, shape index: {}]
  %s5 = inlined_call_operand.vmem [shape: bf16[128,128], index: 5, kind: input, shape index: {}]
  %s6 = inlined_call_operand.vmem [shape: f32[128,1], index: 6, kind: input, shape index: {}]
  %s7 = inlined_call_operand.vmem [shape: bf16[8,128], index: 7, kind: input, shape index: {}]
  %s8 = inlined_call_operand.vmem [shape: f32[8,1], index: 8, kind: input, shape index: {}]
  %s9 = inlined_call_operand.hbm [shape: f32[8,24], index: 9, kind: output, shape index: {}]
  %s10 = sld [smem:[#allocation0]]
  $region46: #{tpu_custom_call.1} parent=0
    _
  %s12 = ssub.s32 1, %s10
  %s13 = scalar_select 0, %s12, %s10
  %v14 = vstv %s2
  %15 = vst [vmem:[#allocation2] sm:$0x1] %v14
  $region1: #{tpu_custom_call.1} parent=0
    #allocation3 [shape = 'u8[4096]{0}', space=vmem, size = 0x1000, scoped, tag = 'output window, operand 0, single buffered']
    #allocation4 [shape = 's32[1]{0}', space=sflag, size = 0x4, scoped, tag = 'scoped memory for tpu_custom_call.1']
    %16 = vsyncpa [#allocation4], 0
    // Predicated region
    $region2: #{tpu_custom_call.1} parent=1 // pred_check
      _
    $region3: #{tpu_custom_call.1} parent=1 // pred_check_branch
      %18 = sbr.rel (0) target = $region5
    $region4: #{tpu_custom_call.1} parent=1 // pred_region
      _
    $region5: #{tpu_custom_call.1} parent=1 // pred_fallthru
      _
    // Predicated region
    $region6: #{tpu_custom_call.1} parent=1 // pred_check
      _
    $region7: #{tpu_custom_call.1} parent=1 // pred_check_branch
      %20 = sbr.rel (0) target = $region9
    $region8: #{tpu_custom_call.1} parent=1 // pred_region
      _
    $region9: #{tpu_custom_call.1} parent=1 // pred_fallthru
      _
    // Predicated region
    $region10: #{tpu_custom_call.1} parent=1 // pred_check
      _
    $region11: #{tpu_custom_call.1} parent=1 // pred_check_branch
      %22 = sbr.rel (0) target = $region13
    $region12: #{tpu_custom_call.1} parent=1 // pred_region
      _
    $region13: #{tpu_custom_call.1} parent=1 // pred_fallthru
      _
    // Predicated region
    $region14: #{tpu_custom_call.1} parent=1 // pred_check
      _
    $region15: #{tpu_custom_call.1} parent=1 // pred_check_branch
      %24 = sbr.rel (0) target = $region17
    $region16: #{tpu_custom_call.1} parent=1 // pred_region
      _
    $region17: #{tpu_custom_call.1} parent=1 // pred_fallthru
      _
    // Predicated region
    $region18: #{tpu_custom_call.1} parent=1 // pred_check
      _
    $region19: #{tpu_custom_call.1} parent=1 // pred_check_branch
      %26 = sbr.rel (0) target = $region21
    $region20: #{tpu_custom_call.1} parent=1 // pred_region
      _
    $region21: #{tpu_custom_call.1} parent=1 // pred_fallthru
      _
    // Predicated region
    $region22: #{tpu_custom_call.1} parent=1 // pred_check
      _
    $region23: #{tpu_custom_call.1} parent=1 // pred_check_branch
      %28 = sbr.rel (0) target = $region25
    $region24: #{tpu_custom_call.1} parent=1 // pred_region
      _
    $region25: #{tpu_custom_call.1} parent=1 // pred_fallthru
      _
    // Predicated region
    $region26: #{tpu_custom_call.1} parent=1 // pred_check
      _
    $region27: #{tpu_custom_call.1} parent=1 // pred_check_branch
      %30 = sbr.rel (0) target = $region29
    $region28: #{tpu_custom_call.1} parent=1 // pred_region
      _
    $region29: #{tpu_custom_call.1} parent=1 // pred_fallthru
      _
    // Predicated region
    $region30: #{tpu_custom_call.1} parent=1 // pred_check
      _
    $region31: #{tpu_custom_call.1} parent=1 // pred_check_branch
      %32 = sbr.rel (0) target = $region33
    $region32: #{tpu_custom_call.1} parent=1 // pred_region
      _
    $region33: #{tpu_custom_call.1} parent=1 // pred_fallthru
      _
    // Predicated region
    $region34: #{tpu_custom_call.1} parent=1 // pred_check
      _
    $region35: #{tpu_custom_call.1} parent=1 // pred_check_branch
      %34 = sbr.rel (0) target = $region37
    $region36: #{tpu_custom_call.1} parent=1 // pred_region
      _
    $region37: #{tpu_custom_call.1} parent=1 // pred_fallthru
      _
    %v36 = vld [vmem:[%s0] sm:$0xf]
    %v37 = vld [vmem:[%s0 + $0x4] sm:$0xf]
    %v38 = vld [vmem:[%s0 + $0x8] sm:$0x3]
    %v39 = vunpack.c.l.bf16 %v38
    %v40 = vld [vmem:[%s3] sm:$0xf]
    %v41 = vld [vmem:[%s3 + $0x4] sm:$0xf]
    %v42 = vld [vmem:[%s3 + $0x8] sm:$0xf]
    %v43 = vld [vmem:[%s3 + $0xc] sm:$0xf]
    %v44 = vld [vmem:[%s3 + $0x10] sm:$0xf]
    %v45 = vld [vmem:[%s3 + $0x14] sm:$0xf]
    %v46 = vld [vmem:[%s3 + $0x18] sm:$0xf]
    %v47 = vld [vmem:[%s3 + $0x1c] sm:$0xf]
    %v48 = vld [vmem:[%s3 + $0x20] sm:$0xf]
    %v49 = vld [vmem:[%s3 + $0x24] sm:$0xf]
    %v50 = vld [vmem:[%s3 + $0x28] sm:$0xf]
    %v51 = vld [vmem:[%s3 + $0x2c] sm:$0xf]
    %v52 = vld [vmem:[%s3 + $0x30] sm:$0xf]
    %v53 = vld [vmem:[%s3 + $0x34] sm:$0xf]
    %v54 = vld [vmem:[%s3 + $0x38] sm:$0xf]
    %v55 = vld [vmem:[%s3 + $0x3c] sm:$0xf]
    %v56 = vld [vmem:[%s4] sm:$0xff]
    %v57 = vld [vmem:[%s4 + $0x8] sm:$0xff]
    %v58 = vld [vmem:[%s4 + $0x10] sm:$0xff]
    %v59 = vld [vmem:[%s4 + $0x18] sm:$0xff]
    %v60 = vld [vmem:[%s4 + $0x20] sm:$0xff]
    %v61 = vld [vmem:[%s4 + $0x28] sm:$0xff]
    %v62 = vld [vmem:[%s4 + $0x30] sm:$0xff]
    %v63 = vld [vmem:[%s4 + $0x38] sm:$0xff]
    %v64 = vld [vmem:[%s4 + $0x40] sm:$0xff]
    %v65 = vld [vmem:[%s4 + $0x48] sm:$0xff]
    %v66 = vld [vmem:[%s4 + $0x50] sm:$0xff]
    %v67 = vld [vmem:[%s4 + $0x58] sm:$0xff]
    %v68 = vld [vmem:[%s4 + $0x60] sm:$0xff]
    %v69 = vld [vmem:[%s4 + $0x68] sm:$0xff]
    %v70 = vld [vmem:[%s4 + $0x70] sm:$0xff]
    %v71 = vld [vmem:[%s4 + $0x78] sm:$0xff]
    %v72 = vld [vmem:[%s5] sm:$0xf]
    %v73 = vld [vmem:[%s5 + $0x4] sm:$0xf]
    %v74 = vld [vmem:[%s5 + $0x8] sm:$0xf]
    %v75 = vld [vmem:[%s5 + $0xc] sm:$0xf]
    %v76 = vld [vmem:[%s5 + $0x10] sm:$0xf]
    %v77 = vld [vmem:[%s5 + $0x14] sm:$0xf]
    %v78 = vld [vmem:[%s5 + $0x18] sm:$0xf]
    %v79 = vld [vmem:[%s5 + $0x1c] sm:$0xf]
    %v80 = vld [vmem:[%s5 + $0x20] sm:$0xf]
    %v81 = vld [vmem:[%s5 + $0x24] sm:$0xf]
    %v82 = vld [vmem:[%s5 + $0x28] sm:$0xf]
    %v83 = vld [vmem:[%s5 + $0x2c] sm:$0xf]
    %v84 = vld [vmem:[%s5 + $0x30] sm:$0xf]
    %v85 = vld [vmem:[%s5 + $0x34] sm:$0xf]
    %v86 = vld [vmem:[%s5 + $0x38] sm:$0xf]
    %v87 = vld [vmem:[%s5 + $0x3c] sm:$0xf]
    %v88 = vld [vmem:[%s6] sm:$0xff]
    %v89 = vld [vmem:[%s6 + $0x8] sm:$0xff]
    %v90 = vld [vmem:[%s6 + $0x10] sm:$0xff]
    %v91 = vld [vmem:[%s6 + $0x18] sm:$0xff]
    %v92 = vld [vmem:[%s6 + $0x20] sm:$0xff]
    %v93 = vld [vmem:[%s6 + $0x28] sm:$0xff]
    %v94 = vld [vmem:[%s6 + $0x30] sm:$0xff]
    %v95 = vld [vmem:[%s6 + $0x38] sm:$0xff]
    %v96 = vld [vmem:[%s6 + $0x40] sm:$0xff]
    %v97 = vld [vmem:[%s6 + $0x48] sm:$0xff]
    %v98 = vld [vmem:[%s6 + $0x50] sm:$0xff]
    %v99 = vld [vmem:[%s6 + $0x58] sm:$0xff]
    %v100 = vld [vmem:[%s6 + $0x60] sm:$0xff]
    %v101 = vld [vmem:[%s6 + $0x68] sm:$0xff]
    %v102 = vld [vmem:[%s6 + $0x70] sm:$0xff]
    %v103 = vld [vmem:[%s6 + $0x78] sm:$0xff]
    %v104 = vld [vmem:[%s7] sm:$0xf]
    %v105 = vld [vmem:[%s8] sm:$0xff]
    %107 = vset.pattern.permute.xlu0 0
    %108 = vperm.xlu0 %107, %v56
    %v109 = vpop.permute.xlu0 %108
    %112 = vset.pattern.permute.xlu0 0
    %113 = vperm.xlu0 %112, %v57
    %v114 = vpop.permute.xlu0 %113
    %117 = vset.pattern.permute.xlu0 0
    %118 = vperm.xlu0 %117, %v58
    %v119 = vpop.permute.xlu0 %118
    %122 = vset.pattern.permute.xlu0 0
    %123 = vperm.xlu0 %122, %v59
    %v124 = vpop.permute.xlu0 %123
    %127 = vset.pattern.permute.xlu0 0
    %128 = vperm.xlu0 %127, %v60
    %v129 = vpop.permute.xlu0 %128
    %132 = vset.pattern.permute.xlu0 0
    %133 = vperm.xlu0 %132, %v61
    %v134 = vpop.permute.xlu0 %133
    %137 = vset.pattern.permute.xlu0 0
    %138 = vperm.xlu0 %137, %v62
    %v139 = vpop.permute.xlu0 %138
    %142 = vset.pattern.permute.xlu0 0
    %143 = vperm.xlu0 %142, %v63
    %v144 = vpop.permute.xlu0 %143
    %147 = vset.pattern.permute.xlu0 0
    %148 = vperm.xlu0 %147, %v64
    %v149 = vpop.permute.xlu0 %148
    %152 = vset.pattern.permute.xlu0 0
    %153 = vperm.xlu0 %152, %v65
    %v154 = vpop.permute.xlu0 %153
    %157 = vset.pattern.permute.xlu0 0
    %158 = vperm.xlu0 %157, %v66
    %v159 = vpop.permute.xlu0 %158
    %162 = vset.pattern.permute.xlu0 0
    %163 = vperm.xlu0 %162, %v67
    %v164 = vpop.permute.xlu0 %163
    %167 = vset.pattern.permute.xlu0 0
    %168 = vperm.xlu0 %167, %v68
    %v169 = vpop.permute.xlu0 %168
    %172 = vset.pattern.permute.xlu0 0
    %173 = vperm.xlu0 %172, %v69
    %v174 = vpop.permute.xlu0 %173
    %177 = vset.pattern.permute.xlu0 0
    %178 = vperm.xlu0 %177, %v70
    %v179 = vpop.permute.xlu0 %178
    %182 = vset.pattern.permute.xlu0 0
    %183 = vperm.xlu0 %182, %v71
    %v184 = vpop.permute.xlu0 %183
    %v202 = vunpack.c.l.b16 %v40
    %v203 = vunpack.c.l.b16 %v41
    %v204 = vunpack.c.l.b16 %v42
    %v205 = vunpack.c.l.b16 %v43
    %v206 = vunpack.c.l.b16 %v44
    %v207 = vunpack.c.l.b16 %v45
    %v208 = vunpack.c.l.b16 %v46
    %v209 = vunpack.c.l.b16 %v47
    %v210 = vunpack.c.l.b16 %v48
    %v211 = vunpack.c.l.b16 %v49
    %v212 = vunpack.c.l.b16 %v50
    %v213 = vunpack.c.l.b16 %v51
    %v214 = vunpack.c.l.b16 %v52
    %v215 = vunpack.c.l.b16 %v53
    %v216 = vunpack.c.l.b16 %v54
    %v217 = vunpack.c.l.b16 %v55
    %v218 = vpack.c.b16 %v203, %v202
    %v219 = vpack.c.b16 %v205, %v204
    %v220 = vpack.c.b16 %v207, %v206
    %v221 = vpack.c.b16 %v209, %v208
    %v222 = vpack.c.b16 %v211, %v210
    %v223 = vpack.c.b16 %v213, %v212
    %v224 = vpack.c.b16 %v215, %v214
    %v225 = vpack.c.b16 %v217, %v216
    %v228 = vunpack.c.l.b16 %v36
    %v229 = vunpack.c.l.b16 %v37
    %v230 = vpack.c.b16 %v229, %v228
    %vm232 = vcmask 130048
    %v234 = vsel %vm232, %v218, 0
    %v237 = vsel %vm232, %v219, 0
    %v240 = vsel %vm232, %v220, 0
    %v243 = vsel %vm232, %v221, 0
    %v246 = vsel %vm232, %v222, 0
    %v249 = vsel %vm232, %v223, 0
    %v252 = vsel %vm232, %v224, 0
    %v255 = vsel %vm232, %v225, 0
    %257 = vmatprep.subr.bf16.mxu0 0
    %258 = vmatpush1.bf16.msra.mxu0 %v230
    %259 = vmatprep.subr.bf16.mxu0 0
    %260 = vmatpush1.bf16.msra.mxu0 0
    %261 = vmatprep.subr.bf16.mxu0 0
    %262 = vmatpush1.bf16.msra.mxu0 0
    %263 = vmatprep.subr.bf16.mxu0 0
    %264 = vmatpush1.bf16.msra.mxu0 0
    %265 = vmatprep.subr.bf16.mxu0 0
    %266 = vmatpush1.bf16.msra.mxu0 0
    %267 = vmatprep.subr.bf16.mxu0 0
    %268 = vmatpush1.bf16.msra.mxu0 0
    %269 = vmatprep.subr.bf16.mxu0 0
    %270 = vmatpush1.bf16.msra.mxu0 0
    %271 = vmatprep.subr.bf16.mxu0 0
    %272 = vmatpush1.bf16.msra.mxu0 0
    %273 = vmatprep.subr.bf16.mxu0 0
    %274 = vmatpush1.bf16.msra.mxu0 0
    %275 = vmatprep.subr.bf16.mxu0 0
    %276 = vmatpush1.bf16.msra.mxu0 0
    %277 = vmatprep.subr.bf16.mxu0 0
    %278 = vmatpush1.bf16.msra.mxu0 0
    %279 = vmatprep.subr.bf16.mxu0 0
    %280 = vmatpush1.bf16.msra.mxu0 0
    %281 = vmatprep.subr.bf16.mxu0 0
    %282 = vmatpush1.bf16.msra.mxu0 0
    %283 = vmatprep.subr.bf16.mxu0 0
    %284 = vmatpush1.bf16.msra.mxu0 0
    %285 = vmatprep.subr.bf16.mxu0 0
    %286 = vmatpush1.bf16.msra.mxu0 0
    %287 = vmatprep.subr.bf16.mxu0 0
    %288 = vmatpush1.bf16.msra.mxu0 0
    %289 = vmatprep.mubr.bf16.mxu0 0
    %290 = vmatmul.mubr.bf16.gmra.mrb[0].mxu0 %v234
    %v291 = vpop.f32.mrb[0].mxu0
    %v292 = vadd.f32 %v109, %v291
    %v293 = vpop.f32.mrb[0].mxu0
    %v294 = vpop.f32.mrb[0].mxu0
    %v295 = vadd.f32 %v114, %v294
    %v296 = vpop.f32.mrb[0].mxu0
    %297 = vmatprep.mubr.bf16.mxu0 0
    %298 = vmatmul.mubr.bf16.gmra.mrb[0].mxu0 %v237
    %v299 = vpop.f32.mrb[0].mxu0
    %v300 = vadd.f32 %v119, %v299
    %v301 = vpop.f32.mrb[0].mxu0
    %v302 = vpop.f32.mrb[0].mxu0
    %v303 = vadd.f32 %v124, %v302
    %v304 = vpop.f32.mrb[0].mxu0
    %305 = vmatprep.mubr.bf16.mxu0 0
    %306 = vmatmul.mubr.bf16.gmra.mrb[0].mxu0 %v240
    %v307 = vpop.f32.mrb[0].mxu0
    %v308 = vadd.f32 %v129, %v307
    %v309 = vpop.f32.mrb[0].mxu0
    %v310 = vpop.f32.mrb[0].mxu0
    %v311 = vadd.f32 %v134, %v310
    %v312 = vpop.f32.mrb[0].mxu0
    %313 = vmatprep.mubr.bf16.mxu0 0
    %314 = vmatmul.mubr.bf16.gmra.mrb[0].mxu0 %v243
    %v315 = vpop.f32.mrb[0].mxu0
    %v316 = vadd.f32 %v139, %v315
    %v317 = vpop.f32.mrb[0].mxu0
    %v318 = vpop.f32.mrb[0].mxu0
    %v319 = vadd.f32 %v144, %v318
    %v320 = vpop.f32.mrb[0].mxu0
    %321 = vmatprep.mubr.bf16.mxu0 0
    %322 = vmatmul.mubr.bf16.gmra.mrb[0].mxu0 %v246
    %v323 = vpop.f32.mrb[0].mxu0
    %v324 = vadd.f32 %v149, %v323
    %v325 = vpop.f32.mrb[0].mxu0
    %v326 = vpop.f32.mrb[0].mxu0
    %v327 = vadd.f32 %v154, %v326
    %v328 = vpop.f32.mrb[0].mxu0
    %329 = vmatprep.mubr.bf16.mxu0 0
    %330 = vmatmul.mubr.bf16.gmra.mrb[0].mxu0 %v249
    %v331 = vpop.f32.mrb[0].mxu0
    %v332 = vadd.f32 %v159, %v331
    %v333 = vpop.f32.mrb[0].mxu0
    %v334 = vpop.f32.mrb[0].mxu0
    %v335 = vadd.f32 %v164, %v334
    %v336 = vpop.f32.mrb[0].mxu0
    %337 = vmatprep.mubr.bf16.mxu0 0
    %338 = vmatmul.mubr.bf16.gmra.mrb[0].mxu0 %v252
    %v339 = vpop.f32.mrb[0].mxu0
    %v340 = vadd.f32 %v169, %v339
    %v341 = vpop.f32.mrb[0].mxu0
    %v342 = vpop.f32.mrb[0].mxu0
    %v343 = vadd.f32 %v174, %v342
    %v344 = vpop.f32.mrb[0].mxu0
    %345 = vmatprep.mubr.bf16.mxu0 0
    %346 = vmatmul.mubr.bf16.gmra.mrb[0].mxu0 %v255
    %v347 = vpop.f32.mrb[0].mxu0
    %v348 = vadd.f32 %v179, %v347
    %v349 = vpop.f32.mrb[0].mxu0
    %v350 = vpop.f32.mrb[0].mxu0
    %v351 = vadd.f32 %v184, %v350
    %v352 = vpop.f32.mrb[0].mxu0
    %353 = vdwg.mxu0
    %v354 = vtanh.pop %v292
    %v355 = vtanh.pop %v295
    %v356 = vtanh.pop %v300
    %v357 = vtanh.pop %v303
    %v358 = vtanh.pop %v308
    %v359 = vtanh.pop %v311
    %v360 = vtanh.pop %v316
    %v361 = vtanh.pop %v319
    %v362 = vtanh.pop %v324
    %v363 = vtanh.pop %v327
    %v364 = vtanh.pop %v332
    %v365 = vtanh.pop %v335
    %v366 = vtanh.pop %v340
    %v367 = vtanh.pop %v343
    %v368 = vtanh.pop %v348
    %v369 = vtanh.pop %v351
    %v370 = vpack.c.bf16 %v355, %v354
    %v371 = vpack.c.bf16 %v357, %v356
    %v372 = vpack.c.bf16 %v359, %v358
    %v373 = vpack.c.bf16 %v361, %v360
    %v374 = vpack.c.bf16 %v363, %v362
    %v375 = vpack.c.bf16 %v365, %v364
    %v376 = vpack.c.bf16 %v367, %v366
    %v377 = vpack.c.bf16 %v369, %v368
    %379 = vset.pattern.permute.xlu0 0
    %380 = vperm.xlu0 %379, %v88
    %v381 = vpop.permute.xlu0 %380
    %384 = vset.pattern.permute.xlu0 0
    %385 = vperm.xlu0 %384, %v89
    %v386 = vpop.permute.xlu0 %385
    %389 = vset.pattern.permute.xlu0 0
    %390 = vperm.xlu0 %389, %v90
    %v391 = vpop.permute.xlu0 %390
    %394 = vset.pattern.permute.xlu0 0
    %395 = vperm.xlu0 %394, %v91
    %v396 = vpop.permute.xlu0 %395
    %399 = vset.pattern.permute.xlu0 0
    %400 = vperm.xlu0 %399, %v92
    %v401 = vpop.permute.xlu0 %400
    %404 = vset.pattern.permute.xlu0 0
    %405 = vperm.xlu0 %404, %v93
    %v406 = vpop.permute.xlu0 %405
    %409 = vset.pattern.permute.xlu0 0
    %410 = vperm.xlu0 %409, %v94
    %v411 = vpop.permute.xlu0 %410
    %414 = vset.pattern.permute.xlu0 0
    %415 = vperm.xlu0 %414, %v95
    %v416 = vpop.permute.xlu0 %415
    %419 = vset.pattern.permute.xlu0 0
    %420 = vperm.xlu0 %419, %v96
    %v421 = vpop.permute.xlu0 %420
    %424 = vset.pattern.permute.xlu0 0
    %425 = vperm.xlu0 %424, %v97
    %v426 = vpop.permute.xlu0 %425
    %429 = vset.pattern.permute.xlu0 0
    %430 = vperm.xlu0 %429, %v98
    %v431 = vpop.permute.xlu0 %430
    %434 = vset.pattern.permute.xlu0 0
    %435 = vperm.xlu0 %434, %v99
    %v436 = vpop.permute.xlu0 %435
    %439 = vset.pattern.permute.xlu0 0
    %440 = vperm.xlu0 %439, %v100
    %v441 = vpop.permute.xlu0 %440
    %444 = vset.pattern.permute.xlu0 0
    %445 = vperm.xlu0 %444, %v101
    %v446 = vpop.permute.xlu0 %445
    %449 = vset.pattern.permute.xlu0 0
    %450 = vperm.xlu0 %449, %v102
    %v451 = vpop.permute.xlu0 %450
    %454 = vset.pattern.permute.xlu0 0
    %455 = vperm.xlu0 %454, %v103
    %v456 = vpop.permute.xlu0 %455
    %v474 = vunpack.c.l.b16 %v72
    %v475 = vunpack.c.l.b16 %v73
    %v476 = vunpack.c.l.b16 %v74
    %v477 = vunpack.c.l.b16 %v75
    %v478 = vunpack.c.l.b16 %v76
    %v479 = vunpack.c.l.b16 %v77
    %v480 = vunpack.c.l.b16 %v78
    %v481 = vunpack.c.l.b16 %v79
    %v482 = vunpack.c.l.b16 %v80
    %v483 = vunpack.c.l.b16 %v81
    %v484 = vunpack.c.l.b16 %v82
    %v485 = vunpack.c.l.b16 %v83
    %v486 = vunpack.c.l.b16 %v84
    %v487 = vunpack.c.l.b16 %v85
    %v488 = vunpack.c.l.b16 %v86
    %v489 = vunpack.c.l.b16 %v87
    %v490 = vpack.c.b16 %v475, %v474
    %v491 = vpack.c.b16 %v477, %v476
    %v492 = vpack.c.b16 %v479, %v478
    %v493 = vpack.c.b16 %v481, %v480
    %v494 = vpack.c.b16 %v483, %v482
    %v495 = vpack.c.b16 %v485, %v484
    %v496 = vpack.c.b16 %v487, %v486
    %v497 = vpack.c.b16 %v489, %v488
    %506 = vmatprep.subr.bf16.mxu0 0
    %507 = vmatpush1.bf16.msra.mxu0 %v370
    %508 = vmatprep.subr.bf16.mxu0 0
    %509 = vmatpush1.bf16.msra.mxu0 %v371
    %510 = vmatprep.subr.bf16.mxu0 0
    %511 = vmatpush1.bf16.msra.mxu0 %v372
    %512 = vmatprep.subr.bf16.mxu0 0
    %513 = vmatpush1.bf16.msra.mxu0 %v373
    %514 = vmatprep.subr.bf16.mxu0 0
    %515 = vmatpush1.bf16.msra.mxu0 %v374
    %516 = vmatprep.subr.bf16.mxu0 0
    %517 = vmatpush1.bf16.msra.mxu0 %v375
    %518 = vmatprep.subr.bf16.mxu0 0
    %519 = vmatpush1.bf16.msra.mxu0 %v376
    %520 = vmatprep.subr.bf16.mxu0 0
    %521 = vmatpush1.bf16.msra.mxu0 %v377
    %522 = vmatprep.subr.bf16.mxu0 0
    %523 = vmatpush1.bf16.msra.mxu0 0
    %524 = vmatprep.subr.bf16.mxu0 0
    %525 = vmatpush1.bf16.msra.mxu0 0
    %526 = vmatprep.subr.bf16.mxu0 0
    %527 = vmatpush1.bf16.msra.mxu0 0
    %528 = vmatprep.subr.bf16.mxu0 0
    %529 = vmatpush1.bf16.msra.mxu0 0
    %530 = vmatprep.subr.bf16.mxu0 0
    %531 = vmatpush1.bf16.msra.mxu0 0
    %532 = vmatprep.subr.bf16.mxu0 0
    %533 = vmatpush1.bf16.msra.mxu0 0
    %534 = vmatprep.subr.bf16.mxu0 0
    %535 = vmatpush1.bf16.msra.mxu0 0
    %536 = vmatprep.subr.bf16.mxu0 0
    %537 = vmatpush1.bf16.msra.mxu0 0
    %538 = vmatprep.mubr.bf16.mxu0 0
    %539 = vmatmul.mubr.bf16.gmra.mrb[0].mxu0 %v490
    %v540 = vpop.f32.mrb[0].mxu0
    %v541 = vadd.f32 %v381, %v540
    %v542 = vpop.f32.mrb[0].mxu0
    %v543 = vpop.f32.mrb[0].mxu0
    %v544 = vadd.f32 %v386, %v543
    %v545 = vpop.f32.mrb[0].mxu0
    %546 = vmatprep.mubr.bf16.mxu0 0
    %547 = vmatmul.mubr.bf16.gmra.mrb[0].mxu0 %v491
    %v548 = vpop.f32.mrb[0].mxu0
    %v549 = vadd.f32 %v391, %v548
    %v550 = vpop.f32.mrb[0].mxu0
    %v551 = vpop.f32.mrb[0].mxu0
    %v552 = vadd.f32 %v396, %v551
    %v553 = vpop.f32.mrb[0].mxu0
    %554 = vmatprep.mubr.bf16.mxu0 0
    %555 = vmatmul.mubr.bf16.gmra.mrb[0].mxu0 %v492
    %v556 = vpop.f32.mrb[0].mxu0
    %v557 = vadd.f32 %v401, %v556
    %v558 = vpop.f32.mrb[0].mxu0
    %v559 = vpop.f32.mrb[0].mxu0
    %v560 = vadd.f32 %v406, %v559
    %v561 = vpop.f32.mrb[0].mxu0
    %562 = vmatprep.mubr.bf16.mxu0 0
    %563 = vmatmul.mubr.bf16.gmra.mrb[0].mxu0 %v493
    %v564 = vpop.f32.mrb[0].mxu0
    %v565 = vadd.f32 %v411, %v564
    %v566 = vpop.f32.mrb[0].mxu0
    %v567 = vpop.f32.mrb[0].mxu0
    %v568 = vadd.f32 %v416, %v567
    %v569 = vpop.f32.mrb[0].mxu0
    %570 = vmatprep.mubr.bf16.mxu0 0
    %571 = vmatmul.mubr.bf16.gmra.mrb[0].mxu0 %v494
    %v572 = vpop.f32.mrb[0].mxu0
    %v573 = vadd.f32 %v421, %v572
    %v574 = vpop.f32.mrb[0].mxu0
    %v575 = vpop.f32.mrb[0].mxu0
    %v576 = vadd.f32 %v426, %v575
    %v577 = vpop.f32.mrb[0].mxu0
    %578 = vmatprep.mubr.bf16.mxu0 0
    %579 = vmatmul.mubr.bf16.gmra.mrb[0].mxu0 %v495
    %v580 = vpop.f32.mrb[0].mxu0
    %v581 = vadd.f32 %v431, %v580
    %v582 = vpop.f32.mrb[0].mxu0
    %v583 = vpop.f32.mrb[0].mxu0
    %v584 = vadd.f32 %v436, %v583
    %v585 = vpop.f32.mrb[0].mxu0
    %586 = vmatprep.mubr.bf16.mxu0 0
    %587 = vmatmul.mubr.bf16.gmra.mrb[0].mxu0 %v496
    %v588 = vpop.f32.mrb[0].mxu0
    %v589 = vadd.f32 %v441, %v588
    %v590 = vpop.f32.mrb[0].mxu0
    %v591 = vpop.f32.mrb[0].mxu0
    %v592 = vadd.f32 %v446, %v591
    %v593 = vpop.f32.mrb[0].mxu0
    %594 = vmatprep.mubr.bf16.mxu0 0
    %595 = vmatmul.mubr.bf16.gmra.mrb[0].mxu0 %v497
    %v596 = vpop.f32.mrb[0].mxu0
    %v597 = vadd.f32 %v451, %v596
    %v598 = vpop.f32.mrb[0].mxu0
    %v599 = vpop.f32.mrb[0].mxu0
    %v600 = vadd.f32 %v456, %v599
    %v601 = vpop.f32.mrb[0].mxu0
    %602 = vdwg.mxu0
    %v603 = vtanh.pop %v541
    %v604 = vtanh.pop %v544
    %v605 = vtanh.pop %v549
    %v606 = vtanh.pop %v552
    %v607 = vtanh.pop %v557
    %v608 = vtanh.pop %v560
    %v609 = vtanh.pop %v565
    %v610 = vtanh.pop %v568
    %v611 = vtanh.pop %v573
    %v612 = vtanh.pop %v576
    %v613 = vtanh.pop %v581
    %v614 = vtanh.pop %v584
    %v615 = vtanh.pop %v589
    %v616 = vtanh.pop %v592
    %v617 = vtanh.pop %v597
    %v618 = vtanh.pop %v600
    %v619 = vpack.c.bf16 %v604, %v603
    %v620 = vpack.c.bf16 %v606, %v605
    %v621 = vpack.c.bf16 %v608, %v607
    %v622 = vpack.c.bf16 %v610, %v609
    %v623 = vpack.c.bf16 %v612, %v611
    %v624 = vpack.c.bf16 %v614, %v613
    %v625 = vpack.c.bf16 %v616, %v615
    %v626 = vpack.c.bf16 %v618, %v617
    %628 = vset.pattern.permute.xlu0 0
    %629 = vperm.xlu0 %628, %v105
    %v630 = vpop.permute.xlu0 %629
    %632 = vmatprep.subr.bf16.mxu0 0
    %633 = vmatpush1.bf16.msra.mxu0 %v619
    %634 = vmatprep.subr.bf16.mxu0 0
    %635 = vmatpush1.bf16.msra.mxu0 %v620
    %636 = vmatprep.subr.bf16.mxu0 0
    %637 = vmatpush1.bf16.msra.mxu0 %v621
    %638 = vmatprep.subr.bf16.mxu0 0
    %639 = vmatpush1.bf16.msra.mxu0 %v622
    %640 = vmatprep.subr.bf16.mxu0 0
    %641 = vmatpush1.bf16.msra.mxu0 %v623
    %642 = vmatprep.subr.bf16.mxu0 0
    %643 = vmatpush1.bf16.msra.mxu0 %v624
    %644 = vmatprep.subr.bf16.mxu0 0
    %645 = vmatpush1.bf16.msra.mxu0 %v625
    %646 = vmatprep.subr.bf16.mxu0 0
    %647 = vmatpush1.bf16.msra.mxu0 %v626
    %648 = vmatprep.subr.bf16.mxu0 0
    %649 = vmatpush1.bf16.msra.mxu0 0
    %650 = vmatprep.subr.bf16.mxu0 0
    %651 = vmatpush1.bf16.msra.mxu0 0
    %652 = vmatprep.subr.bf16.mxu0 0
    %653 = vmatpush1.bf16.msra.mxu0 0
    %654 = vmatprep.subr.bf16.mxu0 0
    %655 = vmatpush1.bf16.msra.mxu0 0
    %656 = vmatprep.subr.bf16.mxu0 0
    %657 = vmatpush1.bf16.msra.mxu0 0
    %658 = vmatprep.subr.bf16.mxu0 0
    %659 = vmatpush1.bf16.msra.mxu0 0
    %660 = vmatprep.subr.bf16.mxu0 0
    %661 = vmatpush1.bf16.msra.mxu0 0
    %662 = vmatprep.subr.bf16.mxu0 0
    %663 = vmatpush1.bf16.msra.mxu0 0
    %664 = vmatprep.mubr.bf16.mxu0 0
    %665 = vmatmul.mubr.bf16.gmra.mrb[0].mxu0 %v104
    %v666 = vpop.f32.mrb[0].mxu0
    %v667 = vadd.f32 %v630, %v666
    %v668 = vpop.f32.mrb[0].mxu0
    %v669 = vpop.f32.mrb[0].mxu0
    %v670 = vpop.f32.mrb[0].mxu0
    %671 = vdwg.mxu0
    %v672 = vsub.f32 %v39, %v667
    %v673 = vld [vmem:[#allocation2] sm:$0x1]
    %v674 = vmul.f32 %v672, %v672
    %v675 = vld [vmem:[%s1] sm:$0xf]
    %677 = vset.pattern.permute.xlu0 0
    %678 = vperm.xlu0 %677, %v675
    %v679 = vpop.permute.xlu0 %678
    %v681 = vmul.f32 %v674, %v679
    %vm682 = vcmask 191488
    %v683 = vsel %vm682, %v681, 0.0
    %v684 = vrot.slane %v683, 4
    %v685 = vadd.f32 %v683, %v684
    %v686 = vrot.slane %v685, 2
    %v687 = vadd.f32 %v685, %v686
    %v688 = vrot.slane %v687, 1
    %v689 = vadd.f32 %v687, %v688
    %691 = vset.pattern.permute.xlu0 0
    %692 = vperm.xlu0 %691, %v673
    %v693 = vpop.permute.xlu0 %692
    %v695 = vlaneseq
    %v696 = vshrl.u32 %v695, 7
    %v697 = vsub.s32 0, %v696
    %v698 = vrot.slane %v693, %v697
    %v699 = vadd.f32 %v698, %v689
    %v700 = vlaneseq
    %v701 = vshrl.u32 %v700, 7
    %vm702 = vcmp.eq.s32.totalorder %v701, 0
    %v703 = vsel %vm702, %v699, 0.0
    %vm704 = vcmp.eq.s32.totalorder %v701, 1
    %v705 = vlaneseq
    %v706 = vshrl.u32 %v705, 7
    %v707 = vsub.s32 4, %v706
    %v708 = vrot.slane %v667, %v707
    %v709 = vsel %vm704, %v708, %v703
    %vm710 = vcmask 195584
    %711 = vst.msk [vmem:[#allocation3] sm:$0xff] %vm710, %v709
    // Predicated region
    $region38: #{tpu_custom_call.1} parent=1 // pred_check
      _
    $region39: #{tpu_custom_call.1} parent=1 // pred_check_branch
      %713 = sbr.rel (0) target = $region41
    $region40: #{tpu_custom_call.1} parent=1 // pred_region
      %s715 = ssub.s32 128, 128
      %716 = vsyncadd [#allocation4], %s715
      %s718 = sshll.u32 [#allocation3], 4
      %s719 = int_to_ptr.vmem [resolvable:$true] %s718
      %721 = dma.vmem_to_hbm [thread:$0]  %s719, 128, %s9, [#allocation4]
    $region41: #{tpu_custom_call.1} parent=1 // pred_fallthru
      _
    // Predicated region
    $region42: #{tpu_custom_call.1} parent=1 // pred_check
      _
    $region43: #{tpu_custom_call.1} parent=1 // pred_check_branch
      %723 = sbr.rel (0) target = $region45
    $region44: #{tpu_custom_call.1} parent=1 // pred_region
      %724 = dma.done [#allocation4], 128
    $region45: #{tpu_custom_call.1} parent=1 // pred_fallthru
      _
    %725 = vsyncpa [#allocation4], 1

</llo_original>
